<compile_context>
chip_gen: v5e
topology: v5e:2x2
jax: 0.10.0
libtpu: 0.0.40
codegen_flags: <defaults>
</compile_context>

<pallas_src>
import jax
import jax.numpy as jnp
from jax.experimental import pallas as pl
from jax.experimental.pallas import tpu as pltpu


def baseline_kernel(ids_ref, tv_ref, b_ref, out_ref):
    """Scalar-path gather-accumulate + one vectorized sigmoid.

    ids_ref : SMEM (B, S) int32  -- scalar-prefetch token ids
    tv_ref  : SMEM (V+1,) f32    -- fused (emb_table @ fc1_w.T) / S, tv[V] = 0 sentinel
    b_ref   : SMEM (1,)   f32    -- fc1 bias
    out_ref : VMEM (1, B) f32    -- lane-major sigmoid output
    """
    B, S = ids_ref.shape
    V = tv_ref.shape[0] - 1          # last entry is the OOB zero sentinel
    bias = b_ref[0]

    lane = jax.lax.broadcasted_iota(jnp.int32, out_ref.shape, 1)   # (1, B)
    logits = jnp.zeros(out_ref.shape, jnp.float32)

    # Fully unrolled (B*S = 16) scalar gather-accumulate on the scalar ALU:
    # each row's logit = bias + sum_s tv[ids[b, s]].
    for b in range(B):
        acc = bias
        for s in range(S):
            tid = ids_ref[b, s]
            # OOB ids -> sentinel index V (zero contribution, no OOB SMEM read).
            idx = jnp.where((tid >= 0) & (tid < V), tid, V)
            acc = acc + tv_ref[idx]
        # Place the scalar logit into lane b of the (1, B) result.
        logits = jnp.where(lane == b, acc, logits)

    # Single tiny vectorized sigmoid (EUP) on the lane-major result.
    out_ref[...] = jax.nn.sigmoid(logits).astype(out_ref.dtype)


def fuse_params(emb_table, fc1_w, fc1_b, seq_len):
    """One-time weight preprocessing (embedding is frozen): fold fc1 AND the
    1/S of the mean into a per-vocab vector, and append a zero sentinel for
    out-of-range ids.

    Returns tv of shape (V+1,) f32 and the bias as a (1,) f32 array.
    """
    tv = (emb_table.astype(jnp.float32) @ fc1_w.astype(jnp.float32).T).reshape(-1)  # (V,)
    tv = tv * (1.0 / float(seq_len))                                # fold mean's 1/S
    tv = jnp.concatenate([tv, jnp.zeros((1,), jnp.float32)])        # (V+1,) sentinel
    bias = fc1_b.reshape(1).astype(jnp.float32)                     # (1,)
    return tv, bias


def baseline_forward(sentence, tv, bias):
    """sentence: (B, S) integer token ids; tv: (V+1,) fused weights; bias: (1,)."""
    B, S = sentence.shape

    out = pl.pallas_call(
        baseline_kernel,
        out_shape=jax.ShapeDtypeStruct((1, B), jnp.float32),   # lane-major logits
        grid_spec=pltpu.PrefetchScalarGridSpec(
            num_scalar_prefetch=1,          # sentence -> SMEM scalar path
            grid=(1,),                      # single step; don't force extra steps at B=2
            in_specs=[
                pl.BlockSpec(memory_space=pltpu.MemorySpace.SMEM),  # tv  (V+1,) f32
                pl.BlockSpec(memory_space=pltpu.MemorySpace.SMEM),  # bias (1,)  f32
            ],
            out_specs=pl.BlockSpec((1, B), lambda i, ids: (0, 0)),
        ),
        compiler_params=pltpu.CompilerParams(dimension_semantics=("arbitrary",)),
    )(sentence.astype(jnp.int32), tv, bias)

    # Module returns (B, 1); the kernel keeps writeback lane-dense and we
    # reshape outside (trivial at these sizes).
    return out.reshape(B, 1)


if __name__ == "__main__":
    key = jax.random.PRNGKey(0)
    k_ids, k_emb, k_w, k_b = jax.random.split(key, 4)

    batch, seq, vocab_size, embedding_dim = 2, 8, 32, 32

    # Deterministic synthetic "pretrained" embedding table + fc1 params.
    emb_table = jax.random.normal(k_emb, (vocab_size, embedding_dim), jnp.float32)
    fc1_w = jax.random.normal(k_w, (1, embedding_dim), jnp.float32) * 0.1
    fc1_b = jax.random.normal(k_b, (1,), jnp.float32) * 0.1

    sentence = jax.random.randint(k_ids, (batch, seq), 0, vocab_size, jnp.int32)

    # One-time weight preprocessing (outside the per-call path).
    tv, bias = fuse_params(emb_table, fc1_w, fc1_b, seq)

    out = baseline_forward(sentence, tv, bias)
    out = jax.block_until_ready(out)

    # Pure-JAX reference check (same math as the PyTorch module).
    ref = jax.nn.sigmoid(emb_table[sentence].mean(axis=1) @ fc1_w.T + fc1_b)
    assert out.shape == (batch, 1)
    assert jnp.allclose(out, ref, atol=1e-5), (out, ref)

    print("KERNEL_OK")
</pallas_src>

<mosaic_0001>
module attributes {stable_mosaic.version = 11 : i64} {
  func.func @baseline_kernel(%arg0: i32, %arg1: memref<2x8xi32, #tpu.memory_space<smem>>, %arg2: memref<33xf32, #tpu.memory_space<smem>>, %arg3: memref<1xf32, #tpu.memory_space<smem>>, %arg4: memref<1x2xf32, #tpu.memory_space<vmem>>) attributes {dimension_semantics = [#tpu.dimension_semantics<arbitrary>], iteration_bounds = array<i64: 1>, scalar_prefetch = 1 : i64, scratch_operands = 0 : i64, tpu.core_type = #tpu.core_type<tc>, window_params = [{transform_indices = @transform_0, window_bounds = array<i64: 33>}, {transform_indices = @transform_1, window_bounds = array<i64: 1>}, {pipeline_mode = #tpu.pipeline_mode<synchronous>, transform_indices = @transform_2, window_bounds = array<i64: 1, 2>}]} {
    %c0 = arith.constant 0 : index
    %0 = memref.load %arg3[%c0] : memref<1xf32, #tpu.memory_space<smem>>
    %1 = tpu.iota {dimensions = array<i32: 1>} : vector<1x2xi32>
    %cst = arith.constant 0.000000e+00 : f32
    %2 = vector.broadcast %cst : f32 to vector<1x2xf32>
    %c0_0 = arith.constant 0 : index
    %c0_1 = arith.constant 0 : index
    %3 = memref.load %arg1[%c0_0, %c0_1] : memref<2x8xi32, #tpu.memory_space<smem>>
    %c0_i32 = arith.constant 0 : i32
    %4 = arith.cmpi sge, %3, %c0_i32 : i32
    %c32_i32 = arith.constant 32 : i32
    %5 = arith.cmpi slt, %3, %c32_i32 : i32
    %6 = arith.andi %4, %5 : i1
    %c32_i32_2 = arith.constant 32 : i32
    %7 = arith.select %6, %3, %c32_i32_2 : i32
    %8 = arith.index_cast %7 : i32 to index
    %9 = memref.load %arg2[%8] : memref<33xf32, #tpu.memory_space<smem>>
    %10 = arith.addf %0, %9 : f32
    %c0_3 = arith.constant 0 : index
    %c1 = arith.constant 1 : index
    %11 = memref.load %arg1[%c0_3, %c1] : memref<2x8xi32, #tpu.memory_space<smem>>
    %c0_i32_4 = arith.constant 0 : i32
    %12 = arith.cmpi sge, %11, %c0_i32_4 : i32
    %c32_i32_5 = arith.constant 32 : i32
    %13 = arith.cmpi slt, %11, %c32_i32_5 : i32
    %14 = arith.andi %12, %13 : i1
    %c32_i32_6 = arith.constant 32 : i32
    %15 = arith.select %14, %11, %c32_i32_6 : i32
    %16 = arith.index_cast %15 : i32 to index
    %17 = memref.load %arg2[%16] : memref<33xf32, #tpu.memory_space<smem>>
    %18 = arith.addf %10, %17 : f32
    %c0_7 = arith.constant 0 : index
    %c2 = arith.constant 2 : index
    %19 = memref.load %arg1[%c0_7, %c2] : memref<2x8xi32, #tpu.memory_space<smem>>
    %c0_i32_8 = arith.constant 0 : i32
    %20 = arith.cmpi sge, %19, %c0_i32_8 : i32
    %c32_i32_9 = arith.constant 32 : i32
    %21 = arith.cmpi slt, %19, %c32_i32_9 : i32
    %22 = arith.andi %20, %21 : i1
    %c32_i32_10 = arith.constant 32 : i32
    %23 = arith.select %22, %19, %c32_i32_10 : i32
    %24 = arith.index_cast %23 : i32 to index
    %25 = memref.load %arg2[%24] : memref<33xf32, #tpu.memory_space<smem>>
    %26 = arith.addf %18, %25 : f32
    %c0_11 = arith.constant 0 : index
    %c3 = arith.constant 3 : index
    %27 = memref.load %arg1[%c0_11, %c3] : memref<2x8xi32, #tpu.memory_space<smem>>
    %c0_i32_12 = arith.constant 0 : i32
    %28 = arith.cmpi sge, %27, %c0_i32_12 : i32
    %c32_i32_13 = arith.constant 32 : i32
    %29 = arith.cmpi slt, %27, %c32_i32_13 : i32
    %30 = arith.andi %28, %29 : i1
    %c32_i32_14 = arith.constant 32 : i32
    %31 = arith.select %30, %27, %c32_i32_14 : i32
    %32 = arith.index_cast %31 : i32 to index
    %33 = memref.load %arg2[%32] : memref<33xf32, #tpu.memory_space<smem>>
    %34 = arith.addf %26, %33 : f32
    %c0_15 = arith.constant 0 : index
    %c4 = arith.constant 4 : index
    %35 = memref.load %arg1[%c0_15, %c4] : memref<2x8xi32, #tpu.memory_space<smem>>
    %c0_i32_16 = arith.constant 0 : i32
    %36 = arith.cmpi sge, %35, %c0_i32_16 : i32
    %c32_i32_17 = arith.constant 32 : i32
    %37 = arith.cmpi slt, %35, %c32_i32_17 : i32
    %38 = arith.andi %36, %37 : i1
    %c32_i32_18 = arith.constant 32 : i32
    %39 = arith.select %38, %35, %c32_i32_18 : i32
    %40 = arith.index_cast %39 : i32 to index
    %41 = memref.load %arg2[%40] : memref<33xf32, #tpu.memory_space<smem>>
    %42 = arith.addf %34, %41 : f32
    %c0_19 = arith.constant 0 : index
    %c5 = arith.constant 5 : index
    %43 = memref.load %arg1[%c0_19, %c5] : memref<2x8xi32, #tpu.memory_space<smem>>
    %c0_i32_20 = arith.constant 0 : i32
    %44 = arith.cmpi sge, %43, %c0_i32_20 : i32
    %c32_i32_21 = arith.constant 32 : i32
    %45 = arith.cmpi slt, %43, %c32_i32_21 : i32
    %46 = arith.andi %44, %45 : i1
    %c32_i32_22 = arith.constant 32 : i32
    %47 = arith.select %46, %43, %c32_i32_22 : i32
    %48 = arith.index_cast %47 : i32 to index
    %49 = memref.load %arg2[%48] : memref<33xf32, #tpu.memory_space<smem>>
    %50 = arith.addf %42, %49 : f32
    %c0_23 = arith.constant 0 : index
    %c6 = arith.constant 6 : index
    %51 = memref.load %arg1[%c0_23, %c6] : memref<2x8xi32, #tpu.memory_space<smem>>
    %c0_i32_24 = arith.constant 0 : i32
    %52 = arith.cmpi sge, %51, %c0_i32_24 : i32
    %c32_i32_25 = arith.constant 32 : i32
    %53 = arith.cmpi slt, %51, %c32_i32_25 : i32
    %54 = arith.andi %52, %53 : i1
    %c32_i32_26 = arith.constant 32 : i32
    %55 = arith.select %54, %51, %c32_i32_26 : i32
    %56 = arith.index_cast %55 : i32 to index
    %57 = memref.load %arg2[%56] : memref<33xf32, #tpu.memory_space<smem>>
    %58 = arith.addf %50, %57 : f32
    %c0_27 = arith.constant 0 : index
    %c7 = arith.constant 7 : index
    %59 = memref.load %arg1[%c0_27, %c7] : memref<2x8xi32, #tpu.memory_space<smem>>
    %c0_i32_28 = arith.constant 0 : i32
    %60 = arith.cmpi sge, %59, %c0_i32_28 : i32
    %c32_i32_29 = arith.constant 32 : i32
    %61 = arith.cmpi slt, %59, %c32_i32_29 : i32
    %62 = arith.andi %60, %61 : i1
    %c32_i32_30 = arith.constant 32 : i32
    %63 = arith.select %62, %59, %c32_i32_30 : i32
    %64 = arith.index_cast %63 : i32 to index
    %65 = memref.load %arg2[%64] : memref<33xf32, #tpu.memory_space<smem>>
    %66 = arith.addf %58, %65 : f32
    %c0_i32_31 = arith.constant 0 : i32
    %67 = vector.broadcast %c0_i32_31 : i32 to vector<1x2xi32>
    %68 = arith.cmpi eq, %1, %67 : vector<1x2xi32>
    %69 = vector.broadcast %66 : f32 to vector<1x2xf32>
    %70 = arith.select %68, %69, %2 : vector<1x2xi1>, vector<1x2xf32>
    %c1_32 = arith.constant 1 : index
    %c0_33 = arith.constant 0 : index
    %71 = memref.load %arg1[%c1_32, %c0_33] : memref<2x8xi32, #tpu.memory_space<smem>>
    %c0_i32_34 = arith.constant 0 : i32
    %72 = arith.cmpi sge, %71, %c0_i32_34 : i32
    %c32_i32_35 = arith.constant 32 : i32
    %73 = arith.cmpi slt, %71, %c32_i32_35 : i32
    %74 = arith.andi %72, %73 : i1
    %c32_i32_36 = arith.constant 32 : i32
    %75 = arith.select %74, %71, %c32_i32_36 : i32
    %76 = arith.index_cast %75 : i32 to index
    %77 = memref.load %arg2[%76] : memref<33xf32, #tpu.memory_space<smem>>
    %78 = arith.addf %0, %77 : f32
    %c1_37 = arith.constant 1 : index
    %c1_38 = arith.constant 1 : index
    %79 = memref.load %arg1[%c1_37, %c1_38] : memref<2x8xi32, #tpu.memory_space<smem>>
    %c0_i32_39 = arith.constant 0 : i32
    %80 = arith.cmpi sge, %79, %c0_i32_39 : i32
    %c32_i32_40 = arith.constant 32 : i32
    %81 = arith.cmpi slt, %79, %c32_i32_40 : i32
    %82 = arith.andi %80, %81 : i1
    %c32_i32_41 = arith.constant 32 : i32
    %83 = arith.select %82, %79, %c32_i32_41 : i32
    %84 = arith.index_cast %83 : i32 to index
    %85 = memref.load %arg2[%84] : memref<33xf32, #tpu.memory_space<smem>>
    %86 = arith.addf %78, %85 : f32
    %c1_42 = arith.constant 1 : index
    %c2_43 = arith.constant 2 : index
    %87 = memref.load %arg1[%c1_42, %c2_43] : memref<2x8xi32, #tpu.memory_space<smem>>
    %c0_i32_44 = arith.constant 0 : i32
    %88 = arith.cmpi sge, %87, %c0_i32_44 : i32
    %c32_i32_45 = arith.constant 32 : i32
    %89 = arith.cmpi slt, %87, %c32_i32_45 : i32
    %90 = arith.andi %88, %89 : i1
    %c32_i32_46 = arith.constant 32 : i32
    %91 = arith.select %90, %87, %c32_i32_46 : i32
    %92 = arith.index_cast %91 : i32 to index
    %93 = memref.load %arg2[%92] : memref<33xf32, #tpu.memory_space<smem>>
    %94 = arith.addf %86, %93 : f32
    %c1_47 = arith.constant 1 : index
    %c3_48 = arith.constant 3 : index
    %95 = memref.load %arg1[%c1_47, %c3_48] : memref<2x8xi32, #tpu.memory_space<smem>>
    %c0_i32_49 = arith.constant 0 : i32
    %96 = arith.cmpi sge, %95, %c0_i32_49 : i32
    %c32_i32_50 = arith.constant 32 : i32
    %97 = arith.cmpi slt, %95, %c32_i32_50 : i32
    %98 = arith.andi %96, %97 : i1
    %c32_i32_51 = arith.constant 32 : i32
    %99 = arith.select %98, %95, %c32_i32_51 : i32
    %100 = arith.index_cast %99 : i32 to index
    %101 = memref.load %arg2[%100] : memref<33xf32, #tpu.memory_space<smem>>
    %102 = arith.addf %94, %101 : f32
    %c1_52 = arith.constant 1 : index
    %c4_53 = arith.constant 4 : index
    %103 = memref.load %arg1[%c1_52, %c4_53] : memref<2x8xi32, #tpu.memory_space<smem>>
    %c0_i32_54 = arith.constant 0 : i32
    %104 = arith.cmpi sge, %103, %c0_i32_54 : i32
    %c32_i32_55 = arith.constant 32 : i32
    %105 = arith.cmpi slt, %103, %c32_i32_55 : i32
    %106 = arith.andi %104, %105 : i1
    %c32_i32_56 = arith.constant 32 : i32
    %107 = arith.select %106, %103, %c32_i32_56 : i32
    %108 = arith.index_cast %107 : i32 to index
    %109 = memref.load %arg2[%108] : memref<33xf32, #tpu.memory_space<smem>>
    %110 = arith.addf %102, %109 : f32
    %c1_57 = arith.constant 1 : index
    %c5_58 = arith.constant 5 : index
    %111 = memref.load %arg1[%c1_57, %c5_58] : memref<2x8xi32, #tpu.memory_space<smem>>
    %c0_i32_59 = arith.constant 0 : i32
    %112 = arith.cmpi sge, %111, %c0_i32_59 : i32
    %c32_i32_60 = arith.constant 32 : i32
    %113 = arith.cmpi slt, %111, %c32_i32_60 : i32
    %114 = arith.andi %112, %113 : i1
    %c32_i32_61 = arith.constant 32 : i32
    %115 = arith.select %114, %111, %c32_i32_61 : i32
    %116 = arith.index_cast %115 : i32 to index
    %117 = memref.load %arg2[%116] : memref<33xf32, #tpu.memory_space<smem>>
    %118 = arith.addf %110, %117 : f32
    %c1_62 = arith.constant 1 : index
    %c6_63 = arith.constant 6 : index
    %119 = memref.load %arg1[%c1_62, %c6_63] : memref<2x8xi32, #tpu.memory_space<smem>>
    %c0_i32_64 = arith.constant 0 : i32
    %120 = arith.cmpi sge, %119, %c0_i32_64 : i32
    %c32_i32_65 = arith.constant 32 : i32
    %121 = arith.cmpi slt, %119, %c32_i32_65 : i32
    %122 = arith.andi %120, %121 : i1
    %c32_i32_66 = arith.constant 32 : i32
    %123 = arith.select %122, %119, %c32_i32_66 : i32
    %124 = arith.index_cast %123 : i32 to index
    %125 = memref.load %arg2[%124] : memref<33xf32, #tpu.memory_space<smem>>
    %126 = arith.addf %118, %125 : f32
    %c1_67 = arith.constant 1 : index
    %c7_68 = arith.constant 7 : index
    %127 = memref.load %arg1[%c1_67, %c7_68] : memref<2x8xi32, #tpu.memory_space<smem>>
    %c0_i32_69 = arith.constant 0 : i32
    %128 = arith.cmpi sge, %127, %c0_i32_69 : i32
    %c32_i32_70 = arith.constant 32 : i32
    %129 = arith.cmpi slt, %127, %c32_i32_70 : i32
    %130 = arith.andi %128, %129 : i1
    %c32_i32_71 = arith.constant 32 : i32
    %131 = arith.select %130, %127, %c32_i32_71 : i32
    %132 = arith.index_cast %131 : i32 to index
    %133 = memref.load %arg2[%132] : memref<33xf32, #tpu.memory_space<smem>>
    %134 = arith.addf %126, %133 : f32
    %c1_i32 = arith.constant 1 : i32
    %135 = vector.broadcast %c1_i32 : i32 to vector<1x2xi32>
    %136 = arith.cmpi eq, %1, %135 : vector<1x2xi32>
    %137 = vector.broadcast %134 : f32 to vector<1x2xf32>
    %138 = arith.select %136, %137, %70 : vector<1x2xi1>, vector<1x2xf32>
    %139 = arith.negf %138 : vector<1x2xf32>
    %140 = math.exp %139 : vector<1x2xf32>
    %cst_72 = arith.constant 1.000000e+00 : f32
    %141 = vector.broadcast %cst_72 : f32 to vector<1x2xf32>
    %142 = arith.addf %141, %140 : vector<1x2xf32>
    %143 = arith.divf %141, %142 : vector<1x2xf32>
    %c0_73 = arith.constant 0 : index
    %c0_74 = arith.constant 0 : index
    %144 = vector.load %arg4[%c0_73, %c0_74] : memref<1x2xf32, #tpu.memory_space<vmem>>, vector<1x2xf32>
    tpu.vector_store %arg4[%c0_73, %c0_74], %143 {strides = array<i32>} : memref<1x2xf32, #tpu.memory_space<vmem>>, vector<1x2xf32>,
    return
  }
  func.func @transform_0(%arg0: i32, %arg1: memref<2x8xi32, #tpu.memory_space<smem>>) -> i32 {
    %c0_i32 = arith.constant 0 : i32
    %c0_i32_0 = arith.constant 0 : i32
    return %c0_i32 : i32
  }
  func.func @transform_1(%arg0: i32, %arg1: memref<2x8xi32, #tpu.memory_space<smem>>) -> i32 {
    %c0_i32 = arith.constant 0 : i32
    %c0_i32_0 = arith.constant 0 : i32
    return %c0_i32 : i32
  }
  func.func @transform_2(%arg0: i32, %arg1: memref<2x8xi32, #tpu.memory_space<smem>>) -> (i32, i32) {
    %c0_i32 = arith.constant 0 : i32
    %c0_i32_0 = arith.constant 0 : i32
    %c0_i32_1 = arith.constant 0 : i32
    return %c0_i32, %c0_i32_0 : i32, i32
  }
}

</mosaic_0001>

<llo_original>
// kernel: tpu_custom_call.1
$region0: #{tpu_custom_call.1}
  #allocation0 [shape = 'u32[]', space=smem, size = 0x4, offset = 0x4, fixed_abs, tag = 'smem constant byte address 0x4 - core index']
  #allocation1 [shape = 'u32[72,128]{1,0:T(1,128)}', space=vmem, size = 0x9000, scoped, tag = 'internal scratch']
  #allocation2 [shape = 's32[1]{0}', space=sflag, size = 0x4, scoped, tag = 'scoped memory for tpu_custom_call.1']
  #allocation3 [shape = 'u8[1024]{0}', space=smem, size = 0x400, scoped, tag = 'prefetched SMEM operand 0']
  #allocation4 [shape = 'f32[1]{0:T(128)S(6)}', space=smem, size = 0x200, scoped, tag = 'scoped memory for tpu_custom_call.1']
  %s0 = inlined_call_operand.vmem [shape: s32[2,8], index: 0, kind: input, shape index: {}]
  %s1 = inlined_call_operand.hbm [shape: f32[33], index: 1, kind: input, shape index: {}]
  %s2 = inlined_call_operand.<no memory space> [shape: f32[1], index: 2, kind: input, shape index: {}]
  %s3 = inlined_call_operand.hbm [shape: f32[1,2], index: 3, kind: output, shape index: {}]
  %s4 = sld [smem:[#allocation0]]
  $region22: #{tpu_custom_call.1} parent=0
    _
  %s6 = ssub.s32 1, %s4
  %s7 = scalar_select 0, %s6, %s4
  %s9 = sshll.u32 %s0, 4
  %s10 = int_to_ptr.vmem [resolvable:$true] %s9
  %12 = dma.vmem_to_smem %s10, 32, [#allocation3], [#allocation2]
  %13 = sst [smem:[#allocation4]] %s2
  %15 = dma.done [#allocation2], 32
  %16 = sfence
  $region1: #{tpu_custom_call.1} parent=0
    #allocation5 [shape = 'u8[512]{0}', space=smem, size = 0x200, scoped, tag = 'input window, operand 1, single buffered']
    #allocation6 [shape = 's32[1]{0}', space=sflag, size = 0x4, scoped, tag = 'scoped memory for tpu_custom_call.1']
    #allocation7 [shape = 's32[1]{0}', space=sflag, size = 0x4, scoped, tag = 'scoped memory for tpu_custom_call.1']
    #allocation8 [shape = 'u8[512]{0}', space=vmem, size = 0x400, scoped, tag = 'output window, operand 0, single buffered']
    %17 = vsyncpa [#allocation7], 0
    %18 = vsyncpa [#allocation6], 0
    // Predicated region
    $region2: #{tpu_custom_call.1} parent=1 // pred_check
      _
    $region3: #{tpu_custom_call.1} parent=1 // pred_check_branch
      %20 = sbr.rel (0) target = $region5
    $region4: #{tpu_custom_call.1} parent=1 // pred_region
      %22 = vsyncadd [#allocation7], 0
      %s24 = sshll.u32 %s1, 4
      %s25 = int_to_ptr.hbm [resolvable:$true] %s24
      %27 = dma.hbm_to_smem %s25, 16, [#allocation5], [#allocation7]
    $region5: #{tpu_custom_call.1} parent=1 // pred_fallthru
      _
    // Predicated region
    $region6: #{tpu_custom_call.1} parent=1 // pred_check
      _
    $region7: #{tpu_custom_call.1} parent=1 // pred_check_branch
      %29 = sbr.rel (0) target = $region9
    $region8: #{tpu_custom_call.1} parent=1 // pred_region
      _
    $region9: #{tpu_custom_call.1} parent=1 // pred_fallthru
      _
    // Predicated region
    $region10: #{tpu_custom_call.1} parent=1 // pred_check
      _
    $region11: #{tpu_custom_call.1} parent=1 // pred_check_branch
      %31 = sbr.rel (0) target = $region13
    $region12: #{tpu_custom_call.1} parent=1 // pred_region
      %33 = dma.done [#allocation7], 16
    $region13: #{tpu_custom_call.1} parent=1 // pred_fallthru
      _
    %34 = sfence
    %s35 = sld [smem:[#allocation4]]
    %v36 = vlaneseq
    %v37 = vand.u32 %v36, 127
    %s38 = sld [smem:[#allocation3]]
    %p39 = scmp.ge.s32.totalorder %s38, 0
    %p40 = scmp.lt.s32.totalorder %s38, 32
    %p41 = pnand %p39, %p40
    %p42 = pneg %p41
    %s43 = scalar_select %p42, %s38, 32
    %s44 = sld [smem:[#allocation5 + %s43]]
    %s45 = sadd.f32 %s35, %s44
    %s46 = sld [smem:[#allocation3 + $0x1]]
    %p47 = scmp.ge.s32.totalorder %s46, 0
    %p48 = scmp.lt.s32.totalorder %s46, 32
    %p49 = pnand %p47, %p48
    %p50 = pneg %p49
    %s51 = scalar_select %p50, %s46, 32
    %s52 = sld [smem:[#allocation5 + %s51]]
    %s53 = sadd.f32 %s45, %s52
    %s54 = sld [smem:[#allocation3 + $0x2]]
    %p55 = scmp.ge.s32.totalorder %s54, 0
    %p56 = scmp.lt.s32.totalorder %s54, 32
    %p57 = pnand %p55, %p56
    %p58 = pneg %p57
    %s59 = scalar_select %p58, %s54, 32
    %s60 = sld [smem:[#allocation5 + %s59]]
    %s61 = sadd.f32 %s53, %s60
    %s62 = sld [smem:[#allocation3 + $0x3]]
    %p63 = scmp.ge.s32.totalorder %s62, 0
    %p64 = scmp.lt.s32.totalorder %s62, 32
    %p65 = pnand %p63, %p64
    %p66 = pneg %p65
    %s67 = scalar_select %p66, %s62, 32
    %s68 = sld [smem:[#allocation5 + %s67]]
    %s69 = sadd.f32 %s61, %s68
    %s70 = sld [smem:[#allocation3 + $0x4]]
    %p71 = scmp.ge.s32.totalorder %s70, 0
    %p72 = scmp.lt.s32.totalorder %s70, 32
    %p73 = pnand %p71, %p72
    %p74 = pneg %p73
    %s75 = scalar_select %p74, %s70, 32
    %s76 = sld [smem:[#allocation5 + %s75]]
    %s77 = sadd.f32 %s69, %s76
    %s78 = sld [smem:[#allocation3 + $0x5]]
    %p79 = scmp.ge.s32.totalorder %s78, 0
    %p80 = scmp.lt.s32.totalorder %s78, 32
    %p81 = pnand %p79, %p80
    %p82 = pneg %p81
    %s83 = scalar_select %p82, %s78, 32
    %s84 = sld [smem:[#allocation5 + %s83]]
    %s85 = sadd.f32 %s77, %s84
    %s86 = sld [smem:[#allocation3 + $0x6]]
    %p87 = scmp.ge.s32.totalorder %s86, 0
    %p88 = scmp.lt.s32.totalorder %s86, 32
    %p89 = pnand %p87, %p88
    %p90 = pneg %p89
    %s91 = scalar_select %p90, %s86, 32
    %s92 = sld [smem:[#allocation5 + %s91]]
    %s93 = sadd.f32 %s85, %s92
    %s94 = sld [smem:[#allocation3 + $0x7]]
    %p95 = scmp.ge.s32.totalorder %s94, 0
    %p96 = scmp.lt.s32.totalorder %s94, 32
    %p97 = pnand %p95, %p96
    %p98 = pneg %p97
    %s99 = scalar_select %p98, %s94, 32
    %s100 = sld [smem:[#allocation5 + %s99]]
    %s101 = sadd.f32 %s93, %s100
    %vm102 = vcmp.eq.s32.totalorder %v37, 0
    %v103 = vstv %s101
    %v104 = vsel %vm102, %v103, 0.0
    %s105 = sld [smem:[#allocation3 + $0x80]]
    %p106 = scmp.ge.s32.totalorder %s105, 0
    %p107 = scmp.lt.s32.totalorder %s105, 32
    %p108 = pnand %p106, %p107
    %p109 = pneg %p108
    %s110 = scalar_select %p109, %s105, 32
    %s111 = sld [smem:[#allocation5 + %s110]]
    %s112 = sadd.f32 %s35, %s111
    %s113 = sld [smem:[#allocation3 + $0x81]]
    %p114 = scmp.ge.s32.totalorder %s113, 0
    %p115 = scmp.lt.s32.totalorder %s113, 32
    %p116 = pnand %p114, %p115
    %p117 = pneg %p116
    %s118 = scalar_select %p117, %s113, 32
    %s119 = sld [smem:[#allocation5 + %s118]]
    %s120 = sadd.f32 %s112, %s119
    %s121 = sld [smem:[#allocation3 + $0x82]]
    %p122 = scmp.ge.s32.totalorder %s121, 0
    %p123 = scmp.lt.s32.totalorder %s121, 32
    %p124 = pnand %p122, %p123
    %p125 = pneg %p124
    %s126 = scalar_select %p125, %s121, 32
    %s127 = sld [smem:[#allocation5 + %s126]]
    %s128 = sadd.f32 %s120, %s127
    %s129 = sld [smem:[#allocation3 + $0x83]]
    %p130 = scmp.ge.s32.totalorder %s129, 0
    %p131 = scmp.lt.s32.totalorder %s129, 32
    %p132 = pnand %p130, %p131
    %p133 = pneg %p132
    %s134 = scalar_select %p133, %s129, 32
    %s135 = sld [smem:[#allocation5 + %s134]]
    %s136 = sadd.f32 %s128, %s135
    %s137 = sld [smem:[#allocation3 + $0x84]]
    %p138 = scmp.ge.s32.totalorder %s137, 0
    %p139 = scmp.lt.s32.totalorder %s137, 32
    %p140 = pnand %p138, %p139
    %p141 = pneg %p140
    %s142 = scalar_select %p141, %s137, 32
    %s143 = sld [smem:[#allocation5 + %s142]]
    %s144 = sadd.f32 %s136, %s143
    %s145 = sld [smem:[#allocation3 + $0x85]]
    %p146 = scmp.ge.s32.totalorder %s145, 0
    %p147 = scmp.lt.s32.totalorder %s145, 32
    %p148 = pnand %p146, %p147
    %p149 = pneg %p148
    %s150 = scalar_select %p149, %s145, 32
    %s151 = sld [smem:[#allocation5 + %s150]]
    %s152 = sadd.f32 %s144, %s151
    %s153 = sld [smem:[#allocation3 + $0x86]]
    %p154 = scmp.ge.s32.totalorder %s153, 0
    %p155 = scmp.lt.s32.totalorder %s153, 32
    %p156 = pnand %p154, %p155
    %p157 = pneg %p156
    %s158 = scalar_select %p157, %s153, 32
    %s159 = sld [smem:[#allocation5 + %s158]]
    %s160 = sadd.f32 %s152, %s159
    %s161 = sld [smem:[#allocation3 + $0x87]]
    %p162 = scmp.ge.s32.totalorder %s161, 0
    %p163 = scmp.lt.s32.totalorder %s161, 32
    %p164 = pnand %p162, %p163
    %p165 = pneg %p164
    %s166 = scalar_select %p165, %s161, 32
    %s167 = sld [smem:[#allocation5 + %s166]]
    %s168 = sadd.f32 %s160, %s167
    %vm169 = vcmp.eq.s32.totalorder %v37, 1
    %v170 = vstv %s168
    %v171 = vsel %vm169, %v170, %v104
    %v172 = vxor.u32 %v171, 2147483648
    %v173 = vmul.f32 %v172, 1.442695
    %v174 = vpow.pop %v173
    %v175 = vadd.f32 %v174, 1.0
    %v176 = vrcp.pop %v175
    %v177 = vmul.f32 %v175, %v176
    %v178 = vsub.f32 1.0, %v177
    %v179 = vmul.f32 %v176, %v178
    %v180 = vadd.f32 %v176, %v179
    %vm181 = vweird.f32 %v175
    %vm182 = vweird.f32 %v176
    %vm183 = vmor %vm181, %vm182
    %v184 = vsel %vm183, %v176, %v180
    %v185 = vand.u32 2147483647, %v175
    %vm186 = vcmp.eq.f32.partialorder %v185, 8.507059e+37
    %v187 = vand.u32 %v175, 2147483648
    %v188 = vor.u32 1.1754944e-38, %v187
    %v189 = vsel %vm186, %v188, %v184
    %v190 = vmul.f32 1.0, %v189
    %vm191 = vcmask 8192
    %192 = vst.msk [vmem:[#allocation8] sm:$0x1] %vm191, %v190
    // Predicated region
    $region14: #{tpu_custom_call.1} parent=1 // pred_check
      _
    $region15: #{tpu_custom_call.1} parent=1 // pred_check_branch
      %194 = sbr.rel (0) target = $region17
    $region16: #{tpu_custom_call.1} parent=1 // pred_region
      %196 = vsyncadd [#allocation6], 0
      %s198 = sshll.u32 [#allocation8], 4
      %s199 = int_to_ptr.vmem [resolvable:$true] %s198
      %s200 = sshll.u32 %s3, 4
      %s201 = int_to_ptr.hbm [resolvable:$true] %s200
      %203 = dma.vmem_to_hbm [thread:$0]  %s199, 16, %s201, [#allocation6]
    $region17: #{tpu_custom_call.1} parent=1 // pred_fallthru
      _
    // Predicated region
    $region18: #{tpu_custom_call.1} parent=1 // pred_check
      _
    $region19: #{tpu_custom_call.1} parent=1 // pred_check_branch
      %205 = sbr.rel (0) target = $region21
    $region20: #{tpu_custom_call.1} parent=1 // pred_region
      %207 = dma.done [#allocation6], 16
    $region21: #{tpu_custom_call.1} parent=1 // pred_fallthru
      _
    %208 = vsyncpa [#allocation6], 1
    %209 = vsyncpa [#allocation7], 1

</llo_original>
